<compile_context>
chip_gen: v6e
topology: v6e:2x2x1
jax: 0.10.0
libtpu: 0.0.40
codegen_flags: <defaults>
</compile_context>

<pallas_src>
import jax
import jax.numpy as jnp
import numpy as np
from jax.experimental import pallas as pl
from jax.experimental.pallas import tpu as pltpu


def _round_up(v, m):
    return ((v + m - 1) // m) * m


def _vmem_capacity_bytes():
    try:
        return int(pltpu.get_tpu_info().vmem_capacity_bytes)
    except Exception:
        return 64 << 20  # conservative fallback (v7x-sized)


def _pick_batch_block(n, c, oc, hw_pad):
    """Batch-block size from a generation-aware VMEM budget.

    Accounts for sublane padding (C and OC rows pad to 8 in VMEM) and for the
    per-sample (OC, C)/(OC, 1) parameter tiles, each of which occupies one
    padded (8, 128) tile.  Everything is double-buffered by BlockSpec (x2).
    Returns (bb, vmem_limit_bytes).
    """
    c_pad, oc_pad = _round_up(c, 8), _round_up(oc, 8)
    io_bytes = (c_pad + oc_pad) * hw_pad * 4           # x block + out block
    param_bytes = 2 * 8 * 128 * 4                      # w_g + b_g padded tiles
    per_sample = (io_bytes + param_bytes) * 2          # double-buffered

    vmem_cap = _vmem_capacity_bytes()
    budget = min(vmem_cap // 4, 24 << 20)              # v7x ~16 MiB, v5e/v6e 24 MiB
    bb = max(1, min(n, budget // per_sample))
    if n >= 2:
        bb = min(bb, pl.cdiv(n, 2))                    # >= 2 grid steps (v7x megacore)

    # headroom for in-kernel f32 temporaries (p and one FMA temp), plus margin
    temps = 2 * bb * oc_pad * hw_pad * 4
    needed = bb * per_sample + temps + (4 << 20)
    vmem_limit = int(min(3 * vmem_cap // 4, max(needed, 16 << 20)))
    return bb, vmem_limit


def _make_attack_kernel(scale, num_c):
    def kernel(x_ref, w_ref, b_ref, o_ref):
        x = x_ref[...]                                 # (bb, C,  HW)
        w = w_ref[...]                                 # (bb, OC, C)
        b = b_ref[...]                                 # (bb, OC, 1)

        # 1x1 conv: C broadcast FMAs over the whole (bb, OC, HW) slab (VPU).
        p = w[:, :, 0:1] * x[:, 0:1, :]
        for ci in range(1, num_c):                     # C is small & static
            p = p + w[:, :, ci:ci + 1] * x[:, ci:ci + 1, :]
        p = p + b

        # Per-(sample, channel) spatial min/max (XLU cross-lane reduce).
        p_min = jnp.min(p, axis=-1, keepdims=True)     # (bb, OC, 1)
        p_max = jnp.max(p, axis=-1, keepdims=True)     # (bb, OC, 1)

        # ((p - min)/(max - min) - 0.5) * 2 * scale fused to one FMA per element.
        # Exact divide on the tiny (bb, OC, 1) operand.
        # NOTE: p_max == p_min (spatially constant map) yields inf/nan, matching
        # the PyTorch reference behavior.
        a = (2.0 * scale) / (p_max - p_min)            # (bb, OC, 1)
        off = p_min * a + scale                        # (bb, OC, 1)
        o_ref[...] = (p * a - off).astype(o_ref.dtype)

    return kernel


def attack_net_forward(x_nchw, target, weight, bias, max_perturbation=32.0):
    """x_nchw: (N, C, H, W) f32; target: (N,) int;
    weight: (num_targets, OC, C); bias: (num_targets, OC, 1)."""
    n, c, h, w = x_nchw.shape
    _, oc, _ = weight.shape
    hw = h * w
    scale = max_perturbation / 128.0

    # Pre-gather per-sample backbone parameters (tiny XLA gather).
    tgt = target.astype(jnp.int32)
    w_g = jnp.take(weight, tgt, axis=0)                # (N, OC, C)
    b_g = jnp.take(bias, tgt, axis=0)                  # (N, OC, 1)

    # Lane-dense spatial axis.  Edge-pad HW to a multiple of 128 if needed
    # (padded lanes replicate existing values -> min/max unchanged).
    x_flat = x_nchw.reshape(n, c, hw)                  # pure reshape, no transpose
    hw_pad = _round_up(hw, 128)
    if hw_pad != hw:
        x_flat = jnp.pad(x_flat, ((0, 0), (0, 0), (0, hw_pad - hw)), mode="edge")

    bb, vmem_limit = _pick_batch_block(n, c, oc, hw_pad)
    grid = (pl.cdiv(n, bb),)                           # bb need not divide N

    out = pl.pallas_call(
        _make_attack_kernel(scale, c),
        out_shape=jax.ShapeDtypeStruct((n, oc, hw_pad), jnp.float32),
        grid_spec=pltpu.PrefetchScalarGridSpec(
            num_scalar_prefetch=0,
            grid=grid,
            in_specs=[
                pl.BlockSpec((bb, c, hw_pad), lambda i: (i, 0, 0)),
                pl.BlockSpec((bb, oc, c), lambda i: (i, 0, 0)),
                pl.BlockSpec((bb, oc, 1), lambda i: (i, 0, 0)),
            ],
            out_specs=pl.BlockSpec((bb, oc, hw_pad), lambda i: (i, 0, 0)),
        ),
        compiler_params=pltpu.CompilerParams(
            dimension_semantics=("parallel",),
            vmem_limit_bytes=vmem_limit),
    )(x_flat, w_g, b_g)

    if hw_pad != hw:
        out = out[:, :, :hw]
    return out.reshape(n, oc, h, w)                    # pure reshape, no transpose


def attack_net_reference(x_nchw, target, weight, bias, max_perturbation=32.0):
    """Pure-JAX reference that mirrors the PyTorch forward exactly."""
    n, c, h, w = x_nchw.shape
    num_targets, oc, _ = weight.shape
    w_full = weight.reshape(num_targets * oc, c)       # (K*OC, C)
    b_full = bias.reshape(num_targets * oc)            # (K*OC,)
    out = jnp.einsum("nchw,kc->nkhw", x_nchw, w_full) + b_full[None, :, None, None]
    out = out.reshape(n, num_targets, oc, h, w)
    pert = jnp.take_along_axis(
        out, target.reshape(n, 1, 1, 1, 1).astype(jnp.int32), axis=1)[:, 0]  # (N,OC,H,W)
    p_min = pert.min(axis=(2, 3), keepdims=True)
    p_max = pert.max(axis=(2, 3), keepdims=True)
    pert = ((pert - p_min) / (p_max - p_min) - 0.5) * 2.0
    return pert * (max_perturbation / 128.0)


if __name__ == "__main__":
    N, C, H, W = 2, 4, 16, 16
    NUM_TARGETS, OUT_CHANNELS = 4, 3
    MAX_PERT = 32.0

    key = jax.random.PRNGKey(0)
    kx, kw, kb, kt = jax.random.split(key, 4)

    x = jax.random.normal(kx, (N, C, H, W), dtype=jnp.float32)
    target = jax.random.randint(kt, (N,), 0, NUM_TARGETS, dtype=jnp.int32)

    # deterministic synthetic backbone parameters (1x1 conv, out-channel-major).
    weight = 0.1 * jax.random.normal(
        kw, (NUM_TARGETS, OUT_CHANNELS, C), dtype=jnp.float32)
    bias = 0.01 * jax.random.normal(
        kb, (NUM_TARGETS, OUT_CHANNELS, 1), dtype=jnp.float32)

    out = attack_net_forward(x, target, weight, bias, MAX_PERT)
    out = jax.block_until_ready(out)

    ref = attack_net_reference(x, target, weight, bias, MAX_PERT)
    assert out.shape == (N, OUT_CHANNELS, H, W), out.shape
    assert np.allclose(np.asarray(out), np.asarray(ref), atol=1e-5, rtol=1e-5)

    print("KERNEL_OK")
</pallas_src>

<mosaic_0001>
module attributes {stable_mosaic.version = 11 : i64} {
  func.func @kernel(%arg0: i32, %arg1: memref<1x4x256xf32, #tpu.memory_space<vmem>>, %arg2: memref<1x3x4xf32, #tpu.memory_space<vmem>>, %arg3: memref<1x3x1xf32, #tpu.memory_space<vmem>>, %arg4: memref<1x3x256xf32, #tpu.memory_space<vmem>>) attributes {dimension_semantics = [#tpu.dimension_semantics<parallel>], iteration_bounds = array<i64: 2>, scalar_prefetch = 0 : i64, scratch_operands = 0 : i64, tpu.core_type = #tpu.core_type<tc>, window_params = [{transform_indices = @transform_0, window_bounds = array<i64: 1, 4, 256>}, {transform_indices = @transform_1, window_bounds = array<i64: 1, 3, 4>}, {transform_indices = @transform_2, window_bounds = array<i64: 1, 3, 1>}, {transform_indices = @transform_3, window_bounds = array<i64: 1, 3, 256>}]} {
    %c0 = arith.constant 0 : index
    %c0_0 = arith.constant 0 : index
    %c0_1 = arith.constant 0 : index
    %0 = vector.load %arg1[%c0, %c0_0, %c0_1] : memref<1x4x256xf32, #tpu.memory_space<vmem>>, vector<1x4x256xf32>
    %c0_2 = arith.constant 0 : index
    %c0_3 = arith.constant 0 : index
    %c0_4 = arith.constant 0 : index
    %1 = vector.load %arg2[%c0_2, %c0_3, %c0_4] : memref<1x3x4xf32, #tpu.memory_space<vmem>>, vector<1x3x4xf32>
    %c0_5 = arith.constant 0 : index
    %c0_6 = arith.constant 0 : index
    %c0_7 = arith.constant 0 : index
    %2 = vector.load %arg3[%c0_5, %c0_6, %c0_7] : memref<1x3x1xf32, #tpu.memory_space<vmem>>, vector<1x3x1xf32>
    %3 = vector.extract_strided_slice %1 {offsets = [0, 0, 0], sizes = [1, 3, 1], strides = [1, 1, 1]} : vector<1x3x4xf32> to vector<1x3x1xf32>
    %4 = vector.extract_strided_slice %0 {offsets = [0, 0, 0], sizes = [1, 1, 256], strides = [1, 1, 1]} : vector<1x4x256xf32> to vector<1x1x256xf32>
    %5 = vector.broadcast %3 : vector<1x3x1xf32> to vector<1x3x256xf32>
    %6 = vector.broadcast %4 : vector<1x1x256xf32> to vector<1x3x256xf32>
    %7 = arith.mulf %5, %6 : vector<1x3x256xf32>
    %8 = vector.extract_strided_slice %1 {offsets = [0, 0, 1], sizes = [1, 3, 1], strides = [1, 1, 1]} : vector<1x3x4xf32> to vector<1x3x1xf32>
    %9 = vector.extract_strided_slice %0 {offsets = [0, 1, 0], sizes = [1, 1, 256], strides = [1, 1, 1]} : vector<1x4x256xf32> to vector<1x1x256xf32>
    %10 = vector.broadcast %8 : vector<1x3x1xf32> to vector<1x3x256xf32>
    %11 = vector.broadcast %9 : vector<1x1x256xf32> to vector<1x3x256xf32>
    %12 = arith.mulf %10, %11 : vector<1x3x256xf32>
    %13 = arith.addf %7, %12 : vector<1x3x256xf32>
    %14 = vector.extract_strided_slice %1 {offsets = [0, 0, 2], sizes = [1, 3, 1], strides = [1, 1, 1]} : vector<1x3x4xf32> to vector<1x3x1xf32>
    %15 = vector.extract_strided_slice %0 {offsets = [0, 2, 0], sizes = [1, 1, 256], strides = [1, 1, 1]} : vector<1x4x256xf32> to vector<1x1x256xf32>
    %16 = vector.broadcast %14 : vector<1x3x1xf32> to vector<1x3x256xf32>
    %17 = vector.broadcast %15 : vector<1x1x256xf32> to vector<1x3x256xf32>
    %18 = arith.mulf %16, %17 : vector<1x3x256xf32>
    %19 = arith.addf %13, %18 : vector<1x3x256xf32>
    %20 = vector.extract_strided_slice %1 {offsets = [0, 0, 3], sizes = [1, 3, 1], strides = [1, 1, 1]} : vector<1x3x4xf32> to vector<1x3x1xf32>
    %21 = vector.extract_strided_slice %0 {offsets = [0, 3, 0], sizes = [1, 1, 256], strides = [1, 1, 1]} : vector<1x4x256xf32> to vector<1x1x256xf32>
    %22 = vector.broadcast %20 : vector<1x3x1xf32> to vector<1x3x256xf32>
    %23 = vector.broadcast %21 : vector<1x1x256xf32> to vector<1x3x256xf32>
    %24 = arith.mulf %22, %23 : vector<1x3x256xf32>
    %25 = arith.addf %19, %24 : vector<1x3x256xf32>
    %26 = vector.broadcast %2 : vector<1x3x1xf32> to vector<1x3x256xf32>
    %27 = arith.addf %25, %26 : vector<1x3x256xf32>
    %cst = arith.constant dense<0x7F800000> : vector<1x3xf32>
    %28 = vector.multi_reduction <minimumf>, %27, %cst [2] : vector<1x3x256xf32> to vector<1x3xf32>
    %29 = vector.shape_cast %28 : vector<1x3xf32> to vector<1x3x1xf32>
    %cst_8 = arith.constant dense<0xFF800000> : vector<1x3xf32>
    %30 = vector.multi_reduction <maximumf>, %27, %cst_8 [2] : vector<1x3x256xf32> to vector<1x3xf32>
    %31 = vector.shape_cast %30 : vector<1x3xf32> to vector<1x3x1xf32>
    %32 = arith.subf %31, %29 : vector<1x3x1xf32>
    %cst_9 = arith.constant 5.000000e-01 : f32
    %33 = vector.broadcast %cst_9 : f32 to vector<1x3x1xf32>
    %34 = arith.divf %33, %32 : vector<1x3x1xf32>
    %35 = arith.mulf %29, %34 : vector<1x3x1xf32>
    %cst_10 = arith.constant 2.500000e-01 : f32
    %36 = vector.broadcast %cst_10 : f32 to vector<1x3x1xf32>
    %37 = arith.addf %35, %36 : vector<1x3x1xf32>
    %38 = vector.broadcast %34 : vector<1x3x1xf32> to vector<1x3x256xf32>
    %39 = arith.mulf %27, %38 : vector<1x3x256xf32>
    %40 = vector.broadcast %37 : vector<1x3x1xf32> to vector<1x3x256xf32>
    %41 = arith.subf %39, %40 : vector<1x3x256xf32>
    %c0_11 = arith.constant 0 : index
    %c0_12 = arith.constant 0 : index
    %c0_13 = arith.constant 0 : index
    %42 = vector.load %arg4[%c0_11, %c0_12, %c0_13] : memref<1x3x256xf32, #tpu.memory_space<vmem>>, vector<1x3x256xf32>
    tpu.vector_store %arg4[%c0_11, %c0_12, %c0_13], %41 {strides = array<i32>} : memref<1x3x256xf32, #tpu.memory_space<vmem>>, vector<1x3x256xf32>,
    return
  }
  func.func @transform_0(%arg0: i32) -> (i32, i32, i32) {
    %c0_i32 = arith.constant 0 : i32
    %c0_i32_0 = arith.constant 0 : i32
    %c0_i32_1 = arith.constant 0 : i32
    return %arg0, %c0_i32, %c0_i32_0 : i32, i32, i32
  }
  func.func @transform_1(%arg0: i32) -> (i32, i32, i32) {
    %c0_i32 = arith.constant 0 : i32
    %c0_i32_0 = arith.constant 0 : i32
    %c0_i32_1 = arith.constant 0 : i32
    return %arg0, %c0_i32, %c0_i32_0 : i32, i32, i32
  }
  func.func @transform_2(%arg0: i32) -> (i32, i32, i32) {
    %c0_i32 = arith.constant 0 : i32
    %c0_i32_0 = arith.constant 0 : i32
    %c0_i32_1 = arith.constant 0 : i32
    return %arg0, %c0_i32, %c0_i32_0 : i32, i32, i32
  }
  func.func @transform_3(%arg0: i32) -> (i32, i32, i32) {
    %c0_i32 = arith.constant 0 : i32
    %c0_i32_0 = arith.constant 0 : i32
    %c0_i32_1 = arith.constant 0 : i32
    return %arg0, %c0_i32, %c0_i32_0 : i32, i32, i32
  }
}

</mosaic_0001>

<llo_original>
// kernel: tpu_custom_call.1
$region0: #{tpu_custom_call.1}
  #allocation0 [shape = 'u32[]', space=smem, size = 0x4, offset = 0x4, fixed_abs, tag = 'smem constant byte address 0x4 - core index']
  #allocation1 [shape = 'u32[144,128]{1,0:T(1,128)}', space=vmem, size = 0x12000, scoped, tag = 'internal scratch']
  %s0 = inlined_call_operand.vmem [shape: f32[2,4,256], index: 0, kind: input, shape index: {}]
  %s1 = inlined_call_operand.vmem [shape: f32[2,3,4], index: 1, kind: input, shape index: {}]
  %s2 = inlined_call_operand.vmem [shape: f32[2,3,1], index: 2, kind: input, shape index: {}]
  %s3 = inlined_call_operand.vmem [shape: f32[2,3,256], index: 3, kind: output, shape index: {}]
  %s4 = sld [smem:[#allocation0]]
  $region45: #{tpu_custom_call.1} parent=0
    _
  %s6 = ssub.s32 1, %s4
  %s7 = scalar_select 0, %s6, %s4
  loop: start=0, step=1, limit=4
  $region2: #{tpu_custom_call.1} parent=0 // loop_pre_header
    _
  $region3: #{tpu_custom_call.1} parent=0 // loop_header
    %s9 = sphi 0, %s13
    %p10 = scmp.ge.s32.totalorder %s9, 4
    %s19 = sphi 0, %s21
    %s22 = sphi 0, %s19
    %s23 = sphi 0, %s22
    %s39 = sphi 0, %s23
    %s45 = sphi 0, %s47
    %s48 = sphi 0, %s45
    %s49 = sphi 0, %s48
    %s65 = sphi 0, %s49
    %s71 = sphi 0, %s73
    %s74 = sphi 0, %s71
    %s75 = sphi 0, %s74
    %s91 = sphi 0, %s75
    %s97 = sphi 0, %s99
    %s100 = sphi 0, %s97
    %s101 = sphi 0, %s100
    %s117 = sphi 0, %s101
  $region4: #{tpu_custom_call.1} parent=0 // loop_header_branch
    %12 = sbr.rel (%p10) target = $region8
  $region5: #{tpu_custom_call.1} parent=0 // loop_body
    %s14 = ssub.s32 %s9, 1
    %s15 = ssub.s32 %s9, 2
    %s16 = sadd.s32 %s9, 1
    %s17 = ssub.s32 %s9, %s16
    %p18 = scmp.eq.s32.totalorder %s17, 0
    %s20 = sadd.s32 %s19, 1
    %s21 = scalar_select %p18, %s19, %s20
    %p24 = pneg %p18
    %p25 = scmp.eq.s32.totalorder %s9, 1
    %p26 = por %p24, %p25
    %p27 = scmp.ne.s32.totalorder %s19, %s22
    %p28 = scmp.eq.s32.totalorder %s9, 0
    %p29 = por %p27, %p28
    %p30 = scmp.ne.s32.totalorder %s19, %s22
    %p31 = scmp.eq.s32.totalorder %s14, 1
    %p32 = por %p30, %p31
    %p33 = scmp.ne.s32.totalorder %s22, %s23
    %p34 = scmp.eq.s32.totalorder %s14, 0
    %p35 = por %p33, %p34
    %p36 = scmp.ne.s32.totalorder %s22, %s23
    %p37 = scmp.eq.s32.totalorder %s15, 1
    %p38 = por %p36, %p37
    %p40 = scmp.ne.s32.totalorder %s23, %s39
    %p41 = scmp.eq.s32.totalorder %s15, 0
    %p42 = por %p40, %p41
    %s43 = ssub.s32 %s9, %s16
    %p44 = scmp.eq.s32.totalorder %s43, 0
    %s46 = sadd.s32 %s45, 1
    %s47 = scalar_select %p44, %s45, %s46
    %p50 = pneg %p44
    %p51 = scmp.eq.s32.totalorder %s9, 1
    %p52 = por %p50, %p51
    %p53 = scmp.ne.s32.totalorder %s45, %s48
    %p54 = scmp.eq.s32.totalorder %s9, 0
    %p55 = por %p53, %p54
    %p56 = scmp.ne.s32.totalorder %s45, %s48
    %p57 = scmp.eq.s32.totalorder %s14, 1
    %p58 = por %p56, %p57
    %p59 = scmp.ne.s32.totalorder %s48, %s49
    %p60 = scmp.eq.s32.totalorder %s14, 0
    %p61 = por %p59, %p60
    %p62 = scmp.ne.s32.totalorder %s48, %s49
    %p63 = scmp.eq.s32.totalorder %s15, 1
    %p64 = por %p62, %p63
    %p66 = scmp.ne.s32.totalorder %s49, %s65
    %p67 = scmp.eq.s32.totalorder %s15, 0
    %p68 = por %p66, %p67
    %s69 = ssub.s32 %s9, %s16
    %p70 = scmp.eq.s32.totalorder %s69, 0
    %s72 = sadd.s32 %s71, 1
    %s73 = scalar_select %p70, %s71, %s72
    %p76 = pneg %p70
    %p77 = scmp.eq.s32.totalorder %s9, 1
    %p78 = por %p76, %p77
    %p79 = scmp.ne.s32.totalorder %s71, %s74
    %p80 = scmp.eq.s32.totalorder %s9, 0
    %p81 = por %p79, %p80
    %p82 = scmp.ne.s32.totalorder %s71, %s74
    %p83 = scmp.eq.s32.totalorder %s14, 1
    %p84 = por %p82, %p83
    %p85 = scmp.ne.s32.totalorder %s74, %s75
    %p86 = scmp.eq.s32.totalorder %s14, 0
    %p87 = por %p85, %p86
    %p88 = scmp.ne.s32.totalorder %s74, %s75
    %p89 = scmp.eq.s32.totalorder %s15, 1
    %p90 = por %p88, %p89
    %p92 = scmp.ne.s32.totalorder %s75, %s91
    %p93 = scmp.eq.s32.totalorder %s15, 0
    %p94 = por %p92, %p93
    %s95 = ssub.s32 %s9, %s16
    %p96 = scmp.eq.s32.totalorder %s95, 0
    %s98 = sadd.s32 %s97, 1
    %s99 = scalar_select %p96, %s97, %s98
    %p102 = pneg %p96
    %p103 = scmp.eq.s32.totalorder %s9, 1
    %p104 = por %p102, %p103
    %p105 = scmp.ne.s32.totalorder %s97, %s100
    %p106 = scmp.eq.s32.totalorder %s9, 0
    %p107 = por %p105, %p106
    %p108 = scmp.ne.s32.totalorder %s97, %s100
    %p109 = scmp.eq.s32.totalorder %s14, 1
    %p110 = por %p108, %p109
    %p111 = scmp.ne.s32.totalorder %s100, %s101
    %p112 = scmp.eq.s32.totalorder %s14, 0
    %p113 = por %p111, %p112
    %p114 = scmp.ne.s32.totalorder %s100, %s101
    %p115 = scmp.eq.s32.totalorder %s15, 1
    %p116 = por %p114, %p115
    %p118 = scmp.ne.s32.totalorder %s101, %s117
    %p119 = scmp.eq.s32.totalorder %s15, 0
    %p120 = por %p118, %p119
    %p121 = scmp.le.s32.totalorder 1, %s9
    %p122 = scmp.lt.s32.totalorder %s9, 3
    %p123 = pnand %p121, %p122
    %p124 = pneg %p123
    // Predicated region
    $region9: #{tpu_custom_call.1} parent=5 // pred_check
      _
    $region10: #{tpu_custom_call.1} parent=5 // pred_check_branch
      %126 = sbr.rel (%p123) target = $region12
    $region11: #{tpu_custom_call.1} parent=5 // pred_region
      %s127 = ssub.s32 %s9, 1
    $region12: #{tpu_custom_call.1} parent=5 // pred_fallthru
      _
    %p128 = scmp.lt.s32.totalorder %s9, 2
    // Predicated region
    $region13: #{tpu_custom_call.1} parent=5 // pred_check
      %p129 = pneg %p128
    $region14: #{tpu_custom_call.1} parent=5 // pred_check_branch
      %131 = sbr.rel (%p129) target = $region16
    $region15: #{tpu_custom_call.1} parent=5 // pred_region
      // Predicated region
      $region17: #{tpu_custom_call.1} parent=15 // pred_check
        %p132 = pneg %p29
      $region18: #{tpu_custom_call.1} parent=15 // pred_check_branch
        %134 = sbr.rel (%p132) target = $region20
      $region19: #{tpu_custom_call.1} parent=15 // pred_region
        %p135 = scmp.lt.s32.totalorder %s9, 1
        %s136 = scalar_select %p135, %s9, 1
        %s137 = smul.addr %s136, 2
        %s138 = smul.addr %s137, 4
        %s139 = scalar_lea.vmem %s0, %s138
      $region20: #{tpu_custom_call.1} parent=15 // pred_fallthru
        _
      // Predicated region
      $region21: #{tpu_custom_call.1} parent=15 // pred_check
        %p140 = pneg %p55
      $region22: #{tpu_custom_call.1} parent=15 // pred_check_branch
        %142 = sbr.rel (%p140) target = $region24
      $region23: #{tpu_custom_call.1} parent=15 // pred_region
        %p143 = scmp.lt.s32.totalorder %s9, 1
        %s144 = scalar_select %p143, %s9, 1
        %s145 = smul.addr %s144, 4
        %s146 = scalar_lea.vmem %s1, %s145
      $region24: #{tpu_custom_call.1} parent=15 // pred_fallthru
        _
      // Predicated region
      $region25: #{tpu_custom_call.1} parent=15 // pred_check
        %p147 = pneg %p81
      $region26: #{tpu_custom_call.1} parent=15 // pred_check_branch
        %149 = sbr.rel (%p147) target = $region28
      $region27: #{tpu_custom_call.1} parent=15 // pred_region
        %p150 = scmp.lt.s32.totalorder %s9, 1
        %s151 = scalar_select %p150, %s9, 1
        %s152 = smul.addr %s151, 4
        %s153 = scalar_lea.vmem %s2, %s152
      $region28: #{tpu_custom_call.1} parent=15 // pred_fallthru
        _
    $region16: #{tpu_custom_call.1} parent=5 // pred_fallthru
      _
    %p154 = scmp.le.s32.totalorder 1, %s9
    %p155 = scmp.lt.s32.totalorder %s9, 3
    %p156 = pnand %p154, %p155
    %p157 = pneg %p156
    // Predicated region
    $region29: #{tpu_custom_call.1} parent=5 // pred_check
      _
    $region30: #{tpu_custom_call.1} parent=5 // pred_check_branch
      %159 = sbr.rel (%p156) target = $region32
    $region31: #{tpu_custom_call.1} parent=5 // pred_region
      %s160 = ssub.s32 %s9, 1
      %p161 = scmp.lt.s32.totalorder %s14, 1
      %s162 = scalar_select %p161, %s14, 1
      %s163 = smul.addr %s162, 2
      %s164 = smul.addr %s163, 4
      %s165 = scalar_lea.vmem %s0, %s164
      %p166 = pneg %p35
      %p167 = pneg %p32
      %p168 = scmp.lt.s32.totalorder %s14, 1
      %s169 = scalar_select %p168, %s14, 1
      %s170 = smul.addr %s169, 4
      %s171 = scalar_lea.vmem %s1, %s170
      %p172 = pneg %p61
      %p173 = pneg %p58
      %p174 = scmp.lt.s32.totalorder %s14, 1
      %s175 = scalar_select %p174, %s14, 1
      %s176 = smul.addr %s175, 4
      %s177 = scalar_lea.vmem %s2, %s176
      %p178 = pneg %p87
      %p179 = pneg %p84
      %p180 = pneg %p113
      %p181 = pneg %p110
      %p182 = scmp.lt.s32.totalorder %s14, 1
      %s183 = scalar_select %p182, %s14, 1
      %s184 = smul.addr %s183, 2
      %s185 = smul.addr %s184, 4
      %s186 = scalar_lea.vmem %s3, %s185
      %p187 = scmp.lt.s32.totalorder %s14, 1
      %s188 = scalar_select %p187, %s14, 1
      %s189 = smul.addr %s188, 2
      %s190 = smul.addr %s189, 4
      %s191 = scalar_lea.vmem %s0, %s190
      %p192 = scmp.lt.s32.totalorder %s14, 1
      %s193 = scalar_select %p192, %s14, 1
      %s194 = smul.addr %s193, 4
      %s195 = scalar_lea.vmem %s1, %s194
      %p196 = scmp.lt.s32.totalorder %s14, 1
      %s197 = scalar_select %p196, %s14, 1
      %s198 = smul.addr %s197, 4
      %s199 = scalar_lea.vmem %s2, %s198
      %p200 = scmp.lt.s32.totalorder %s14, 1
      %s201 = scalar_select %p200, %s14, 1
      %s202 = smul.addr %s201, 2
      %s203 = smul.addr %s202, 4
      %s204 = scalar_lea.vmem %s3, %s203
      %v205 = vld [vmem:[%s191] sm:$0xff]
      %v206 = vld [vmem:[%s195] sm:$0x7]
      %v207 = vld [vmem:[%s199] sm:$0x7]
      %209 = vset.pattern.permute.xlu0 0
      %210 = vperm.xlu0 %209, %v206
      %v211 = vpop.permute.xlu0 %210
      %v214 = vlaneseq
      %v215 = vshrl.u32 %v214, 7
      %v216 = vsub.s32 0, %v215
      %v217 = vrot.slane %v205, %v216
      %v218 = vlaneseq
      %v219 = vshrl.u32 %v218, 7
      %v220 = vsub.s32 4, %v219
      %v221 = vrot.slane %v205, %v220
      %v224 = vlaneseq
      %v225 = vshrl.u32 %v224, 7
      %v226 = vsub.s32 0, %v225
      %v227 = vrot.slane %v217, %v226
      %v228 = vlaneseq
      %v229 = vshrl.u32 %v228, 7
      %v230 = vsub.s32 0, %v229
      %v231 = vrot.slane %v221, %v230
      %v232 = vmul.f32 %v211, %v227
      %v233 = vmul.f32 %v211, %v231
      %234 = vset.pattern.permute.xlu0 1
      %235 = vperm.xlu0 %234, %v206
      %v236 = vpop.permute.xlu0 %235
      %v238 = vlaneseq
      %v239 = vshrl.u32 %v238, 7
      %v240 = vsub.s32 1, %v239
      %v241 = vrot.slane %v205, %v240
      %v242 = vlaneseq
      %v243 = vshrl.u32 %v242, 7
      %v244 = vsub.s32 5, %v243
      %v245 = vrot.slane %v205, %v244
      %v248 = vlaneseq
      %v249 = vshrl.u32 %v248, 7
      %v250 = vsub.s32 1, %v249
      %v251 = vrot.slane %v241, %v250
      %v252 = vlaneseq
      %v253 = vshrl.u32 %v252, 7
      %v254 = vsub.s32 1, %v253
      %v255 = vrot.slane %v245, %v254
      %v256 = vmul.f32 %v236, %v251
      %v257 = vmul.f32 %v236, %v255
      %v258 = vadd.f32 %v232, %v256
      %v259 = vadd.f32 %v233, %v257
      %260 = vset.pattern.permute.xlu0 2
      %261 = vperm.xlu0 %260, %v206
      %v262 = vpop.permute.xlu0 %261
      %v264 = vlaneseq
      %v265 = vshrl.u32 %v264, 7
      %v266 = vsub.s32 2, %v265
      %v267 = vrot.slane %v205, %v266
      %v268 = vlaneseq
      %v269 = vshrl.u32 %v268, 7
      %v270 = vsub.s32 6, %v269
      %v271 = vrot.slane %v205, %v270
      %v274 = vlaneseq
      %v275 = vshrl.u32 %v274, 7
      %v276 = vsub.s32 2, %v275
      %v277 = vrot.slane %v267, %v276
      %v278 = vlaneseq
      %v279 = vshrl.u32 %v278, 7
      %v280 = vsub.s32 2, %v279
      %v281 = vrot.slane %v271, %v280
      %v282 = vmul.f32 %v262, %v277
      %v283 = vmul.f32 %v262, %v281
      %v284 = vadd.f32 %v258, %v282
      %v285 = vadd.f32 %v259, %v283
      %286 = vset.pattern.permute.xlu0 3
      %287 = vperm.xlu0 %286, %v206
      %v288 = vpop.permute.xlu0 %287
      %v290 = vlaneseq
      %v291 = vshrl.u32 %v290, 7
      %v292 = vsub.s32 3, %v291
      %v293 = vrot.slane %v205, %v292
      %v294 = vlaneseq
      %v295 = vshrl.u32 %v294, 7
      %v296 = vsub.s32 7, %v295
      %v297 = vrot.slane %v205, %v296
      %v300 = vlaneseq
      %v301 = vshrl.u32 %v300, 7
      %v302 = vsub.s32 3, %v301
      %v303 = vrot.slane %v293, %v302
      %v304 = vlaneseq
      %v305 = vshrl.u32 %v304, 7
      %v306 = vsub.s32 3, %v305
      %v307 = vrot.slane %v297, %v306
      %v308 = vmul.f32 %v288, %v303
      %v309 = vmul.f32 %v288, %v307
      %v310 = vadd.f32 %v284, %v308
      %v311 = vadd.f32 %v285, %v309
      %313 = vset.pattern.permute.xlu0 0
      %314 = vperm.xlu0 %313, %v207
      %v315 = vpop.permute.xlu0 %314
      %v317 = vadd.f32 %v310, %v315
      %v318 = vadd.f32 %v311, %v315
      %vm319 = vcmask 1042432
      %v320 = vsel %vm319, %v317, inf
      %v321 = vsel %vm319, %v318, inf
      %v322 = vmin.f32 %v320, %v321
      %323 = vmin.xlane.f32.xlu0 %v322
      %v324 = vpop.xlane.xlu0 %323
      %v325 = vsel %vm319, %v317, -inf
      %v326 = vsel %vm319, %v318, -inf
      %v327 = vmax.f32 %v325, %v326
      %328 = vmax.xlane.f32.xlu0 %v327
      %v329 = vpop.xlane.xlu0 %328
      %v330 = vsub.f32 %v329, %v324
      %v331 = vrcp.pop %v330
      %v332 = vmul.f32 0.5, %v331
      %v333 = vmul.f32 %v324, %v332
      %v334 = vadd.f32 %v333, 0.25
      %v335 = vmul.f32 %v317, %v332
      %v336 = vmul.f32 %v318, %v332
      %v337 = vsub.f32 %v335, %v334
      %v338 = vsub.f32 %v336, %v334
      %v341 = vcombine.low %v337, %v338
      %343 = vst [vmem:[%s204] sm:$0x77] %v341
      %p344 = scmp.lt.s32.totalorder %s14, 1
      %s345 = scalar_select %p344, %s14, 1
      %s346 = smul.addr %s345, 2
      %s347 = smul.addr %s346, 4
      %s348 = scalar_lea.vmem %s3, %s347
      // Predicated region
      $region33: #{tpu_custom_call.1} parent=31 // pred_check
        %p349 = pneg %p110
      $region34: #{tpu_custom_call.1} parent=31 // pred_check_branch
        %351 = sbr.rel (%p349) target = $region36
      $region35: #{tpu_custom_call.1} parent=31 // pred_region
        _
      $region36: #{tpu_custom_call.1} parent=31 // pred_fallthru
        _
    $region32: #{tpu_custom_call.1} parent=5 // pred_fallthru
      _
    %p352 = scmp.le.s32.totalorder 2, %s9
    // Predicated region
    $region37: #{tpu_custom_call.1} parent=5 // pred_check
      %p353 = pneg %p352
    $region38: #{tpu_custom_call.1} parent=5 // pred_check_branch
      %355 = sbr.rel (%p353) target = $region40
    $region39: #{tpu_custom_call.1} parent=5 // pred_region
      %s356 = ssub.s32 %s9, 2
      // Predicated region
      $region41: #{tpu_custom_call.1} parent=39 // pred_check
        %p357 = pneg %p116
      $region42: #{tpu_custom_call.1} parent=39 // pred_check_branch
        %359 = sbr.rel (%p357) target = $region44
      $region43: #{tpu_custom_call.1} parent=39 // pred_region
        %p360 = scmp.lt.s32.totalorder %s15, 1
        %s361 = scalar_select %p360, %s15, 1
        %s362 = smul.addr %s361, 2
        %s363 = smul.addr %s362, 4
        %s364 = scalar_lea.vmem %s3, %s363
      $region44: #{tpu_custom_call.1} parent=39 // pred_fallthru
        _
    $region40: #{tpu_custom_call.1} parent=5 // pred_fallthru
      _
  $region6: #{tpu_custom_call.1} parent=0 // loop_footer
    %s13 = sadd.s32 1, %s9
  $region7: #{tpu_custom_call.1} parent=0 // loop_footer_branch
    %8 = sbr.rel target = $region3
  $region8: #{tpu_custom_call.1} parent=0 // loop_exit
    _

</llo_original>
